<compile_context>
chip_gen: v6e
topology: v6e:2x2x1
jax: 0.10.0
libtpu: 0.0.40
codegen_flags: <defaults>
</compile_context>

<pallas_src>
import jax
import jax.numpy as jnp
from jax import lax
from jax.experimental import pallas as pl
from jax.experimental.pallas import tpu as pltpu


def passage_att_kernel(rep_ref, rel_ref, w_ref, b_ref, out_ref):
    # rep_ref: (bt, L, H)   block of token-level representations
    # rel_ref: (N_pad, H)   zero-padded relation embeddings (resident across grid)
    # w_ref:   (1, H)       fc weight as a lane-dense row
    # b_ref:   (1,)         fc bias, SMEM scalar
    # out_ref: (bt, N_pad)  sigmoid(fc(att_scores @ rep)) — lane-dense slab
    bt, L, H = rep_ref.shape
    n_pad = rel_ref.shape[0]

    rep = rep_ref[...]                                      # (bt, L, H) f32

    # att logits: scores[b, l, n] = rep[b, l, :] . rel[n, :]
    # One MXU pass over the whole batch block; contraction over H, no transpose.
    scores = lax.dot_general(
        rep.reshape(bt * L, H), rel_ref[...],
        dimension_numbers=(((1,), (1,)), ((), ())),
        preferred_element_type=jnp.float32,
    ).reshape(bt, L, n_pad)                                 # (bt, L, N_pad)

    # softmax over the token axis L (axis=1), numerically stabilized.
    m = jnp.max(scores, axis=1, keepdims=True)              # (bt, 1, N_pad)
    e = jnp.exp(scores - m)
    denom = jnp.sum(e, axis=1, keepdims=True)               # (bt, 1, N_pad)
    p = e * pl.reciprocal(denom, approx=True)               # (bt, L, N_pad)

    # Fused fc head: fc(p^T @ rep) == p^T @ (rep @ w) + b.
    # v[b, l] = rep[b, l, :] . w  (lane reduce), never build the (N, H) logits.
    v = jnp.sum(rep * w_ref[...], axis=-1, keepdims=True)   # (bt, L, 1)
    z = jnp.sum(p * v, axis=1) + b_ref[0]                   # (bt, N_pad)
    out_ref[...] = jax.nn.sigmoid(z)                        # dense (bt, N_pad) store


def passage_attention_forward(rep, relation_embeddings, fc_w, fc_b, *, block_b=8):
    """rep: (B, L, H) f32; relation_embeddings: (N, H); fc_w: (1, H); fc_b: (1,).

    Returns rel_scores (B, N) f32 (matches the PyTorch module's forward).
    """
    B, L, H = rep.shape
    N = relation_embeddings.shape[0]

    # Pad the relation axis to a multiple of 128 so the per-step output slab is
    # lane-dense (unmasked vst); padded rows are zeros and sliced off below.
    n_pad = (N + 127) // 128 * 128
    rel_p = jnp.zeros((n_pad, H), rep.dtype).at[:N, :].set(relation_embeddings)

    # Batch-block the grid; pad B up to a multiple of the block. Padded (zero)
    # rows produce harmless values that are sliced off.
    bt = min(block_b, B)
    b_pad = (B + bt - 1) // bt * bt
    if b_pad != B:
        rep = jnp.pad(rep, ((0, b_pad - B), (0, 0), (0, 0)))

    out = pl.pallas_call(
        passage_att_kernel,
        out_shape=jax.ShapeDtypeStruct((b_pad, n_pad), jnp.float32),
        grid_spec=pltpu.PrefetchScalarGridSpec(
            num_scalar_prefetch=0,
            grid=(b_pad // bt,),
            in_specs=[
                pl.BlockSpec((bt, L, H), lambda i: (i, 0, 0)),
                pl.BlockSpec((n_pad, H), lambda i: (0, 0)),   # resident across grid
                pl.BlockSpec((1, H), lambda i: (0, 0)),       # resident across grid
                pl.BlockSpec(memory_space=pltpu.MemorySpace.SMEM),  # bias scalar
            ],
            out_specs=pl.BlockSpec((bt, n_pad), lambda i: (i, 0)),
        ),
        compiler_params=pltpu.CompilerParams(
            dimension_semantics=("parallel",)),
    )(rep, rel_p, fc_w, fc_b)

    return out[:B, :N]


def simple_passage_encoder(token, mask, embed_table):
    # Stand-in for the injected `passage_encoder`: embedding lookup + masking.
    # TODO(synk): the real passage_encoder (e.g. PCNN/BERT) is an external
    # module passed into __init__; it is replaced by this deterministic stub.
    rep = embed_table[token]                          # (B, L, H)
    rep = rep * mask[..., None].astype(rep.dtype)     # zero out padded tokens
    # NOTE: as in the original module, padded tokens are only zeroed by the
    # encoder; they still participate in the attention softmax (logit = 0).
    return rep


if __name__ == "__main__":
    # Small shapes consistent with the forward: B passages, L tokens, H hidden,
    # N relation classes.
    B, L, H, N, VOCAB = 2, 16, 32, 8, 100

    key = jax.random.PRNGKey(0)
    k_tok, k_emb, k_rel, k_w, k_b = jax.random.split(key, 5)

    # inputs: token ids (B, L) and mask (B, L)
    token = jax.random.randint(k_tok, (B, L), 0, VOCAB, dtype=jnp.int32)
    mask = jnp.ones((B, L), dtype=jnp.int32).at[:, L - 3:].set(0)

    # parameters (deterministic init)
    embed_table = jax.random.normal(k_emb, (VOCAB, H), dtype=jnp.float32) * 0.1
    # xavier_normal_ for relation_embeddings: std = sqrt(2 / (fan_in + fan_out))
    xavier_std = (2.0 / (N + H)) ** 0.5
    relation_embeddings = jax.random.normal(k_rel, (N, H), dtype=jnp.float32) * xavier_std
    # nn.Linear(H, 1): weight (1, H), bias (1) — kept in PyTorch layout (lane-dense row)
    bound = 1.0 / H ** 0.5
    fc_w = (jax.random.uniform(k_w, (1, H), dtype=jnp.float32) - 0.5) * 2.0 * bound
    fc_b = (jax.random.uniform(k_b, (1,), dtype=jnp.float32) - 0.5) * 2.0 * bound

    # encoder (glue, plain JAX)
    rep = simple_passage_encoder(token, mask, embed_table)   # (B, L, H)

    # Pallas hot path
    rel_scores = passage_attention_forward(rep, relation_embeddings, fc_w, fc_b)
    rel_scores = jax.block_until_ready(rel_scores)

    # pure-JAX reference check (same math as the PyTorch forward)
    att_scores = jnp.einsum("blh,nh->bnl", rep, relation_embeddings)
    att_scores = jax.nn.softmax(att_scores, axis=-1)
    rel_logits = jnp.einsum("bnl,blh->bnh", att_scores, rep)
    ref = jax.nn.sigmoid(jnp.einsum("bnh,h->bn", rel_logits, fc_w[0]) + fc_b[0])

    assert rel_scores.shape == (B, N)
    # slightly relaxed tolerance: softmax denominator uses the EUP approximate
    # reciprocal (pl.reciprocal(..., approx=True))
    assert jnp.allclose(rel_scores, ref, atol=2e-3, rtol=2e-3)
    print("KERNEL_OK")
</pallas_src>

<mosaic_0001>
module attributes {stable_mosaic.version = 11 : i64} {
  func.func @passage_att_kernel(%arg0: i32, %arg1: memref<2x16x32xf32, #tpu.memory_space<vmem>>, %arg2: memref<128x32xf32, #tpu.memory_space<vmem>>, %arg3: memref<1x32xf32, #tpu.memory_space<vmem>>, %arg4: memref<1xf32, #tpu.memory_space<smem>>, %arg5: memref<2x128xf32, #tpu.memory_space<vmem>>) attributes {dimension_semantics = [#tpu.dimension_semantics<parallel>], iteration_bounds = array<i64: 1>, scalar_prefetch = 0 : i64, scratch_operands = 0 : i64, tpu.core_type = #tpu.core_type<tc>, window_params = [{transform_indices = @transform_0, window_bounds = array<i64: 2, 16, 32>}, {pipeline_mode = #tpu.pipeline_mode<synchronous>, transform_indices = @transform_1, window_bounds = array<i64: 128, 32>}, {pipeline_mode = #tpu.pipeline_mode<synchronous>, transform_indices = @transform_2, window_bounds = array<i64: 1, 32>}, {transform_indices = @transform_3, window_bounds = array<i64: 1>}, {transform_indices = @transform_4, window_bounds = array<i64: 2, 128>}]} {
    %c0 = arith.constant 0 : index
    %c0_0 = arith.constant 0 : index
    %c0_1 = arith.constant 0 : index
    %0 = vector.load %arg1[%c0, %c0_0, %c0_1] : memref<2x16x32xf32, #tpu.memory_space<vmem>>, vector<2x16x32xf32>
    %1 = vector.shape_cast %0 : vector<2x16x32xf32> to vector<32x32xf32>
    %c0_2 = arith.constant 0 : index
    %c0_3 = arith.constant 0 : index
    %2 = vector.load %arg2[%c0_2, %c0_3] : memref<128x32xf32, #tpu.memory_space<vmem>>, vector<128x32xf32>
    %cst = arith.constant dense<0.000000e+00> : vector<32x128xf32>
    %3 = tpu.matmul %1, %2, %cst {dimension_numbers = #tpu.dot_dimension_numbers<[1], [1], [0], [0], [0, 0, 1, 0], [], []>} : vector<32x32xf32>, vector<128x32xf32>, vector<32x128xf32> -> vector<32x128xf32>
    %4 = vector.shape_cast %3 : vector<32x128xf32> to vector<2x16x128xf32>
    %cst_4 = arith.constant dense<0xFF800000> : vector<2x128xf32>
    %5 = vector.multi_reduction <maximumf>, %4, %cst_4 [1] : vector<2x16x128xf32> to vector<2x128xf32>
    %6 = vector.shape_cast %5 : vector<2x128xf32> to vector<2x1x128xf32>
    %7 = vector.broadcast %6 : vector<2x1x128xf32> to vector<2x16x128xf32>
    %8 = arith.subf %4, %7 : vector<2x16x128xf32>
    %9 = math.exp %8 : vector<2x16x128xf32>
    %cst_5 = arith.constant dense<0.000000e+00> : vector<2x128xf32>
    %10 = vector.multi_reduction <add>, %9, %cst_5 [1] : vector<2x16x128xf32> to vector<2x128xf32>
    %11 = vector.shape_cast %10 : vector<2x128xf32> to vector<2x1x128xf32>
    %12 = tpu.reciprocal %11 {approx = true} : vector<2x1x128xf32> -> vector<2x1x128xf32>
    %13 = vector.broadcast %12 : vector<2x1x128xf32> to vector<2x16x128xf32>
    %14 = arith.mulf %9, %13 : vector<2x16x128xf32>
    %c0_6 = arith.constant 0 : index
    %c0_7 = arith.constant 0 : index
    %15 = vector.load %arg3[%c0_6, %c0_7] : memref<1x32xf32, #tpu.memory_space<vmem>>, vector<1x32xf32>
    %16 = vector.shape_cast %15 : vector<1x32xf32> to vector<1x1x32xf32>
    %17 = vector.broadcast %16 : vector<1x1x32xf32> to vector<2x16x32xf32>
    %18 = arith.mulf %0, %17 : vector<2x16x32xf32>
    %cst_8 = arith.constant dense<0.000000e+00> : vector<2x16xf32>
    %19 = vector.multi_reduction <add>, %18, %cst_8 [2] : vector<2x16x32xf32> to vector<2x16xf32>
    %20 = vector.shape_cast %19 : vector<2x16xf32> to vector<2x16x1xf32>
    %21 = vector.broadcast %20 : vector<2x16x1xf32> to vector<2x16x128xf32>
    %22 = arith.mulf %14, %21 : vector<2x16x128xf32>
    %cst_9 = arith.constant dense<0.000000e+00> : vector<2x128xf32>
    %23 = vector.multi_reduction <add>, %22, %cst_9 [1] : vector<2x16x128xf32> to vector<2x128xf32>
    %c0_10 = arith.constant 0 : index
    %24 = memref.load %arg4[%c0_10] : memref<1xf32, #tpu.memory_space<smem>>
    %25 = vector.broadcast %24 : f32 to vector<2x128xf32>
    %26 = arith.addf %23, %25 : vector<2x128xf32>
    %27 = arith.negf %26 : vector<2x128xf32>
    %28 = math.exp %27 : vector<2x128xf32>
    %cst_11 = arith.constant 1.000000e+00 : f32
    %29 = vector.broadcast %cst_11 : f32 to vector<2x128xf32>
    %30 = arith.addf %29, %28 : vector<2x128xf32>
    %31 = arith.divf %29, %30 : vector<2x128xf32>
    %c0_12 = arith.constant 0 : index
    %c0_13 = arith.constant 0 : index
    %32 = vector.load %arg5[%c0_12, %c0_13] : memref<2x128xf32, #tpu.memory_space<vmem>>, vector<2x128xf32>
    tpu.vector_store %arg5[%c0_12, %c0_13], %31 {strides = array<i32>} : memref<2x128xf32, #tpu.memory_space<vmem>>, vector<2x128xf32>,
    return
  }
  func.func @transform_0(%arg0: i32) -> (i32, i32, i32) {
    %c0_i32 = arith.constant 0 : i32
    %c0_i32_0 = arith.constant 0 : i32
    %c0_i32_1 = arith.constant 0 : i32
    return %arg0, %c0_i32, %c0_i32_0 : i32, i32, i32
  }
  func.func @transform_1(%arg0: i32) -> (i32, i32) {
    %c0_i32 = arith.constant 0 : i32
    %c0_i32_0 = arith.constant 0 : i32
    %c0_i32_1 = arith.constant 0 : i32
    return %c0_i32, %c0_i32_0 : i32, i32
  }
  func.func @transform_2(%arg0: i32) -> (i32, i32) {
    %c0_i32 = arith.constant 0 : i32
    %c0_i32_0 = arith.constant 0 : i32
    %c0_i32_1 = arith.constant 0 : i32
    return %c0_i32, %c0_i32_0 : i32, i32
  }
  func.func @transform_3(%arg0: i32) -> i32 {
    %c0_i32 = arith.constant 0 : i32
    %c0_i32_0 = arith.constant 0 : i32
    return %c0_i32 : i32
  }
  func.func @transform_4(%arg0: i32) -> (i32, i32) {
    %c0_i32 = arith.constant 0 : i32
    %c0_i32_0 = arith.constant 0 : i32
    return %arg0, %c0_i32 : i32, i32
  }
}

</mosaic_0001>

<llo_original>
// kernel: tpu_custom_call.1
$region0: #{tpu_custom_call.1}
  #allocation0 [shape = 'u32[]', space=smem, size = 0x4, offset = 0x4, fixed_abs, tag = 'smem constant byte address 0x4 - core index']
  #allocation1 [shape = 'u32[144,128]{1,0:T(1,128)}', space=vmem, size = 0x12000, scoped, tag = 'internal scratch']
  #allocation2 [shape = 'f32[1]{0:T(128)S(6)}', space=smem, size = 0x200, scoped, tag = 'scoped memory for tpu_custom_call.1']
  %s0 = inlined_call_operand.vmem [shape: f32[2,16,32], index: 0, kind: input, shape index: {}]
  %s1 = inlined_call_operand.vmem [shape: f32[128,32], index: 1, kind: input, shape index: {}]
  %s2 = inlined_call_operand.vmem [shape: f32[1,32], index: 2, kind: input, shape index: {}]
  %s3 = inlined_call_operand.<no memory space> [shape: f32[1], index: 3, kind: input, shape index: {}]
  %s4 = inlined_call_operand.hbm [shape: f32[2,128], index: 4, kind: output, shape index: {}]
  %s5 = sld [smem:[#allocation0]]
  $region26: #{tpu_custom_call.1} parent=0
    _
  %s7 = ssub.s32 1, %s5
  %s8 = scalar_select 0, %s7, %s5
  %9 = sst [smem:[#allocation2]] %s3
  $region1: #{tpu_custom_call.1} parent=0
    #allocation3 [shape = 'u8[1024]{0}', space=vmem, size = 0x400, scoped, tag = 'output window, operand 0, single buffered']
    #allocation4 [shape = 's32[1]{0}', space=sflag, size = 0x4, scoped, tag = 'scoped memory for tpu_custom_call.1']
    %10 = vsyncpa [#allocation4], 0
    // Predicated region
    $region2: #{tpu_custom_call.1} parent=1 // pred_check
      _
    $region3: #{tpu_custom_call.1} parent=1 // pred_check_branch
      %12 = sbr.rel (0) target = $region5
    $region4: #{tpu_custom_call.1} parent=1 // pred_region
      _
    $region5: #{tpu_custom_call.1} parent=1 // pred_fallthru
      _
    // Predicated region
    $region6: #{tpu_custom_call.1} parent=1 // pred_check
      _
    $region7: #{tpu_custom_call.1} parent=1 // pred_check_branch
      %14 = sbr.rel (0) target = $region9
    $region8: #{tpu_custom_call.1} parent=1 // pred_region
      _
    $region9: #{tpu_custom_call.1} parent=1 // pred_fallthru
      _
    // Predicated region
    $region10: #{tpu_custom_call.1} parent=1 // pred_check
      _
    $region11: #{tpu_custom_call.1} parent=1 // pred_check_branch
      %16 = sbr.rel (0) target = $region13
    $region12: #{tpu_custom_call.1} parent=1 // pred_region
      _
    $region13: #{tpu_custom_call.1} parent=1 // pred_fallthru
      _
    // Predicated region
    $region14: #{tpu_custom_call.1} parent=1 // pred_check
      _
    $region15: #{tpu_custom_call.1} parent=1 // pred_check_branch
      %18 = sbr.rel (0) target = $region17
    $region16: #{tpu_custom_call.1} parent=1 // pred_region
      _
    $region17: #{tpu_custom_call.1} parent=1 // pred_fallthru
      _
    %v19 = vld [vmem:[%s0] sm:$0xff]
    %v20 = vld [vmem:[%s0 + $0x8] sm:$0xff]
    %v21 = vld [vmem:[%s0 + $0x10] sm:$0xff]
    %v22 = vld [vmem:[%s0 + $0x18] sm:$0xff]
    %v23 = vld [vmem:[%s1] sm:$0xff]
    %v24 = vld [vmem:[%s1 + $0x8] sm:$0xff]
    %v25 = vld [vmem:[%s1 + $0x10] sm:$0xff]
    %v26 = vld [vmem:[%s1 + $0x18] sm:$0xff]
    %v27 = vld [vmem:[%s1 + $0x20] sm:$0xff]
    %v28 = vld [vmem:[%s1 + $0x28] sm:$0xff]
    %v29 = vld [vmem:[%s1 + $0x30] sm:$0xff]
    %v30 = vld [vmem:[%s1 + $0x38] sm:$0xff]
    %v31 = vld [vmem:[%s1 + $0x40] sm:$0xff]
    %v32 = vld [vmem:[%s1 + $0x48] sm:$0xff]
    %v33 = vld [vmem:[%s1 + $0x50] sm:$0xff]
    %v34 = vld [vmem:[%s1 + $0x58] sm:$0xff]
    %v35 = vld [vmem:[%s1 + $0x60] sm:$0xff]
    %v36 = vld [vmem:[%s1 + $0x68] sm:$0xff]
    %v37 = vld [vmem:[%s1 + $0x70] sm:$0xff]
    %v38 = vld [vmem:[%s1 + $0x78] sm:$0xff]
    %vm39 = vcmask 261120
    %v41 = vsel %vm39, %v19, 0
    %v44 = vsel %vm39, %v20, 0
    %v47 = vsel %vm39, %v21, 0
    %v50 = vsel %vm39, %v22, 0
    %v53 = vsel %vm39, %v23, 0
    %v56 = vsel %vm39, %v24, 0
    %v59 = vsel %vm39, %v25, 0
    %v62 = vsel %vm39, %v26, 0
    %v65 = vsel %vm39, %v27, 0
    %v68 = vsel %vm39, %v28, 0
    %v71 = vsel %vm39, %v29, 0
    %v74 = vsel %vm39, %v30, 0
    %v77 = vsel %vm39, %v31, 0
    %v80 = vsel %vm39, %v32, 0
    %v83 = vsel %vm39, %v33, 0
    %v86 = vsel %vm39, %v34, 0
    %v89 = vsel %vm39, %v35, 0
    %v92 = vsel %vm39, %v36, 0
    %v95 = vsel %vm39, %v37, 0
    %v98 = vsel %vm39, %v38, 0
    %100 = vmatprep.subr.mxu0 0.0
    %101 = vmatpush1.xpose.msra.mxu0 %v98
    %102 = vmatprep.subr.mxu0 0.0
    %103 = vmatpush1.xpose.msra.mxu0 %v95
    %104 = vmatprep.subr.mxu0 0.0
    %105 = vmatpush1.xpose.msra.mxu0 %v92
    %106 = vmatprep.subr.mxu0 0.0
    %107 = vmatpush1.xpose.msra.mxu0 %v89
    %108 = vmatprep.subr.mxu0 0.0
    %109 = vmatpush1.xpose.msra.mxu0 %v86
    %110 = vmatprep.subr.mxu0 0.0
    %111 = vmatpush1.xpose.msra.mxu0 %v83
    %112 = vmatprep.subr.mxu0 0.0
    %113 = vmatpush1.xpose.msra.mxu0 %v80
    %114 = vmatprep.subr.mxu0 0.0
    %115 = vmatpush1.xpose.msra.mxu0 %v77
    %116 = vmatprep.subr.mxu0 0.0
    %117 = vmatpush1.xpose.msra.mxu0 %v74
    %118 = vmatprep.subr.mxu0 0.0
    %119 = vmatpush1.xpose.msra.mxu0 %v71
    %120 = vmatprep.subr.mxu0 0.0
    %121 = vmatpush1.xpose.msra.mxu0 %v68
    %122 = vmatprep.subr.mxu0 0.0
    %123 = vmatpush1.xpose.msra.mxu0 %v65
    %124 = vmatprep.subr.mxu0 0.0
    %125 = vmatpush1.xpose.msra.mxu0 %v62
    %126 = vmatprep.subr.mxu0 0.0
    %127 = vmatpush1.xpose.msra.mxu0 %v59
    %128 = vmatprep.subr.mxu0 0.0
    %129 = vmatpush1.xpose.msra.mxu0 %v56
    %130 = vmatprep.subr.mxu0 0.0
    %131 = vmatpush1.xpose.msra.mxu0 %v53
    %132 = vmatprep.subr.mxu0 0.0
    %133 = vmatpush2.xpose.msra.mxu0 0.0
    %134 = vmatprep.subr.mxu0 0.0
    %135 = vmatpush2.xpose.msra.mxu0 0.0
    %136 = vmatprep.subr.mxu0 0.0
    %137 = vmatpush2.xpose.msra.mxu0 0.0
    %138 = vmatprep.subr.mxu0 0.0
    %139 = vmatpush2.xpose.msra.mxu0 0.0
    %140 = vmatprep.subr.mxu0 0.0
    %141 = vmatpush2.xpose.msra.mxu0 0.0
    %142 = vmatprep.subr.mxu0 0.0
    %143 = vmatpush2.xpose.msra.mxu0 0.0
    %144 = vmatprep.subr.mxu0 0.0
    %145 = vmatpush2.xpose.msra.mxu0 0.0
    %146 = vmatprep.subr.mxu0 0.0
    %147 = vmatpush2.xpose.msra.mxu0 0.0
    %148 = vmatprep.subr.mxu0 0.0
    %149 = vmatpush2.xpose.msra.mxu0 0.0
    %150 = vmatprep.subr.mxu0 0.0
    %151 = vmatpush2.xpose.msra.mxu0 0.0
    %152 = vmatprep.subr.mxu0 0.0
    %153 = vmatpush2.xpose.msra.mxu0 0.0
    %154 = vmatprep.subr.mxu0 0.0
    %155 = vmatpush2.xpose.msra.mxu0 0.0
    %156 = vmatprep.subr.mxu0 0.0
    %157 = vmatpush2.xpose.msra.mxu0 0.0
    %158 = vmatprep.subr.mxu0 0.0
    %159 = vmatpush2.xpose.msra.mxu0 0.0
    %160 = vmatprep.subr.mxu0 0.0
    %161 = vmatpush2.xpose.msra.mxu0 0.0
    %162 = vmatprep.subr.mxu0 0.0
    %163 = vmatpush2.xpose.msra.mxu0 0.0
    %164 = vmatprep.mubr.f32.mxu0 0.0
    %165 = vmatmul.mubr.f32.gmra.mxu0 %v41
    %v166 = vpop.f32.mrf.mxu0
    %v167 = vadd.f32 0.0, %v166
    %v168 = vpop.f32.mrf.mxu0
    %169 = vmatprep.mubr.f32.mxu0 0.0
    %170 = vmatmul.mubr.f32.gmra.mxu0 %v44
    %v171 = vpop.f32.mrf.mxu0
    %v172 = vadd.f32 0.0, %v171
    %v173 = vpop.f32.mrf.mxu0
    %174 = vmatprep.mubr.f32.mxu0 0.0
    %175 = vmatmul.mubr.f32.gmra.mxu0 %v47
    %v176 = vpop.f32.mrf.mxu0
    %v177 = vadd.f32 0.0, %v176
    %v178 = vpop.f32.mrf.mxu0
    %179 = vmatprep.mubr.f32.mxu0 0.0
    %180 = vmatmul.mubr.f32.gmra.mxu0 %v50
    %v181 = vpop.f32.mrf.mxu0
    %v182 = vadd.f32 0.0, %v181
    %v183 = vpop.f32.mrf.mxu0
    %184 = vdwg.mxu0
    %v185 = vmax.f32 %v167, %v172
    %v186 = vrot.slane %v185, 4
    %v187 = vmax.f32 %v185, %v186
    %v188 = vrot.slane %v187, 2
    %v189 = vmax.f32 %v187, %v188
    %v190 = vrot.slane %v189, 1
    %v191 = vmax.f32 %v189, %v190
    %v192 = vmax.f32 %v177, %v182
    %v193 = vrot.slane %v192, 4
    %v194 = vmax.f32 %v192, %v193
    %v195 = vrot.slane %v194, 2
    %v196 = vmax.f32 %v194, %v195
    %v197 = vrot.slane %v196, 1
    %v198 = vmax.f32 %v196, %v197
    %v199 = vsub.f32 %v167, %v191
    %v200 = vsub.f32 %v172, %v191
    %v201 = vsub.f32 %v177, %v198
    %v202 = vsub.f32 %v182, %v198
    %v203 = vmul.f32 %v199, 1.442695
    %v204 = vpow.pop %v203
    %v205 = vmul.f32 %v200, 1.442695
    %v206 = vpow.pop %v205
    %v207 = vmul.f32 %v201, 1.442695
    %v208 = vpow.pop %v207
    %v209 = vmul.f32 %v202, 1.442695
    %v210 = vpow.pop %v209
    %v211 = vadd.f32 %v204, %v206
    %v212 = vrot.slane %v211, 4
    %v213 = vadd.f32 %v211, %v212
    %v214 = vrot.slane %v213, 2
    %v215 = vadd.f32 %v213, %v214
    %v216 = vrot.slane %v215, 1
    %v217 = vadd.f32 %v215, %v216
    %v218 = vadd.f32 %v208, %v210
    %v219 = vrot.slane %v218, 4
    %v220 = vadd.f32 %v218, %v219
    %v221 = vrot.slane %v220, 2
    %v222 = vadd.f32 %v220, %v221
    %v223 = vrot.slane %v222, 1
    %v224 = vadd.f32 %v222, %v223
    %v225 = vrcp.pop %v217
    %v226 = vrcp.pop %v224
    %v227 = vmul.f32 %v204, %v225
    %v228 = vmul.f32 %v206, %v225
    %v229 = vmul.f32 %v208, %v226
    %v230 = vmul.f32 %v210, %v226
    %v231 = vld [vmem:[%s2] sm:$0x1]
    %v233 = vlaneseq
    %v234 = vshrl.u32 %v233, 7
    %v235 = vsub.s32 0, %v234
    %v236 = vrot.slane %v231, %v235
    %v238 = vmul.f32 %v19, %v236
    %v239 = vmul.f32 %v20, %v236
    %v240 = vmul.f32 %v21, %v236
    %v241 = vmul.f32 %v22, %v236
    %v242 = vsel %vm39, %v238, 0.0
    %243 = vadd.xlane.f32.xlu0 %v242
    %v244 = vpop.xlane.xlu0 %243
    %v245 = vsel %vm39, %v239, 0.0
    %246 = vadd.xlane.f32.xlu0 %v245
    %v247 = vpop.xlane.xlu0 %246
    %v248 = vsel %vm39, %v240, 0.0
    %249 = vadd.xlane.f32.xlu0 %v248
    %v250 = vpop.xlane.xlu0 %249
    %v251 = vsel %vm39, %v241, 0.0
    %252 = vadd.xlane.f32.xlu0 %v251
    %v253 = vpop.xlane.xlu0 %252
    %v254 = vmul.f32 %v227, %v244
    %v255 = vmul.f32 %v228, %v247
    %v256 = vmul.f32 %v229, %v250
    %v257 = vmul.f32 %v230, %v253
    %v258 = vadd.f32 %v254, %v255
    %v259 = vrot.slane %v258, 4
    %v260 = vadd.f32 %v258, %v259
    %v261 = vrot.slane %v260, 2
    %v262 = vadd.f32 %v260, %v261
    %v263 = vrot.slane %v262, 1
    %v264 = vadd.f32 %v262, %v263
    %v265 = vadd.f32 %v256, %v257
    %v266 = vrot.slane %v265, 4
    %v267 = vadd.f32 %v265, %v266
    %v268 = vrot.slane %v267, 2
    %v269 = vadd.f32 %v267, %v268
    %v270 = vrot.slane %v269, 1
    %v271 = vadd.f32 %v269, %v270
    %s272 = sld [smem:[#allocation2]]
    %v273 = vstv %s272
    %v274 = vadd.f32 %v264, %v273
    %v275 = vadd.f32 %v271, %v273
    %v276 = vxor.u32 %v274, 2147483648
    %v277 = vxor.u32 %v275, 2147483648
    %v278 = vmul.f32 %v276, 1.442695
    %v279 = vpow.pop %v278
    %v280 = vmul.f32 %v277, 1.442695
    %v281 = vpow.pop %v280
    %v282 = vadd.f32 %v279, 1.0
    %v283 = vadd.f32 %v281, 1.0
    %v284 = vrcp.pop %v282
    %v285 = vmul.f32 1.0, %v284
    %v286 = vrcp.pop %v283
    %v287 = vmul.f32 1.0, %v286
    %vm290 = vcmask 1041409
    %v291 = vsel %vm290, %v287, %v285
    %293 = vst [vmem:[#allocation3] sm:$0x3] %v291
    // Predicated region
    $region18: #{tpu_custom_call.1} parent=1 // pred_check
      _
    $region19: #{tpu_custom_call.1} parent=1 // pred_check_branch
      %295 = sbr.rel (0) target = $region21
    $region20: #{tpu_custom_call.1} parent=1 // pred_region
      %s297 = ssub.s32 32, 32
      %298 = vsyncadd [#allocation4], %s297
      %s300 = sshll.u32 [#allocation3], 4
      %s301 = int_to_ptr.vmem [resolvable:$true] %s300
      %303 = dma.vmem_to_hbm [thread:$0]  %s301, 32, %s4, [#allocation4]
    $region21: #{tpu_custom_call.1} parent=1 // pred_fallthru
      _
    // Predicated region
    $region22: #{tpu_custom_call.1} parent=1 // pred_check
      _
    $region23: #{tpu_custom_call.1} parent=1 // pred_check_branch
      %305 = sbr.rel (0) target = $region25
    $region24: #{tpu_custom_call.1} parent=1 // pred_region
      %306 = dma.done [#allocation4], 32
    $region25: #{tpu_custom_call.1} parent=1 // pred_fallthru
      _
    %307 = vsyncpa [#allocation4], 1

</llo_original>
